<compile_context>
chip_gen: v6e
topology: v6e:2x2x1
jax: 0.10.0
libtpu: 0.0.40
codegen_flags: <defaults>
</compile_context>

<pallas_src>
import functools

import jax
import jax.numpy as jnp
from jax import lax
from jax.experimental import pallas as pl
from jax.experimental.pallas import tpu as pltpu

KSIZE = 3          # kernel_size=3
SIGMA_LO = 0.1     # sigma=(0.1, 2.0)
SIGMA_HI = 2.0
P_APPLY = 0.2      # p=0.2

_HALO_ROWS = 8     # one sublane tile; halo side-inputs stay (8,128)-aligned


def _gaussian_kernel1d(sigma):
    """torchvision _get_gaussian_kernel1d for kernel_size=3 (symmetric, sums to 1)."""
    ksize_half = (KSIZE - 1) * 0.5
    x = jnp.linspace(-ksize_half, ksize_half, KSIZE)
    pdf = jnp.exp(-0.5 * (x / sigma) ** 2)
    return (pdf / jnp.sum(pdf)).astype(jnp.float32)


# -----------------------------------------------------------------------------
# shifted-neighbor construction: XLU roll (preferred) or slice/concat fallback
# -----------------------------------------------------------------------------

def _shift_roll(x, shift, axis):
    # result[i] = x[i - shift]; the single wrapped row/col is never consumed (callers
    # overwrite it with the reflect / halo value), so rotation semantics are fine.
    return pltpu.roll(x, shift, axis)


def _shift_slice(x, shift, axis):
    # Same contract as _shift_roll for |shift| == 1; the "wrapped" position is filled
    # with the edge value (junk, always overwritten by the caller).
    n = x.shape[axis]
    if shift == 1:
        a = lax.slice_in_dim(x, 0, 1, axis=axis)
        b = lax.slice_in_dim(x, 0, n - 1, axis=axis)
    else:
        a = lax.slice_in_dim(x, 1, n, axis=axis)
        b = lax.slice_in_dim(x, n - 1, n, axis=axis)
    return jnp.concatenate([a, b], axis=axis)


_ROLL_OK = None


def _pick_shift_fn():
    """One-time probe that pltpu.roll lowers (incl. lane dims < 128) and matches
    jnp.roll semantics; otherwise fall back to the slice/concat shifts."""
    global _ROLL_OK
    if _ROLL_OK is None:
        def probe_kernel(x_ref, o_ref):
            x = x_ref[...]
            o_ref[...] = pltpu.roll(x, 1, 1) + 2.0 * pltpu.roll(x, -1, 2)

        try:
            x = jnp.arange(2 * 16 * 16, dtype=jnp.float32).reshape(2, 16, 16)
            y = pl.pallas_call(
                probe_kernel, out_shape=jax.ShapeDtypeStruct(x.shape, x.dtype))(x)
            ref = jnp.roll(x, 1, axis=1) + 2.0 * jnp.roll(x, -1, axis=2)
            _ROLL_OK = bool(jnp.allclose(y, ref))
        except Exception:
            _ROLL_OK = False
    return _shift_roll if _ROLL_OK else _shift_slice


# -----------------------------------------------------------------------------
# kernel bodies
# -----------------------------------------------------------------------------

def _cast_out(out_f32, dtype):
    if jnp.issubdtype(dtype, jnp.integer):
        info = jnp.iinfo(dtype)
        out_f32 = jnp.clip(jnp.round(out_f32), float(info.min), float(info.max))
    return out_f32.astype(dtype)


def _blur_core(x, w_edge, w_mid, shift,
               top_halo=None, bot_halo=None, is_first=None, is_last=None):
    """Separable 3-tap blur of one block of plane rows.

    x: (B, TH, W) f32.  With row-band tiling, top_halo/bot_halo are (B, 1, W) image
    rows just above/below this band, and is_first/is_last mark bands touching the
    image edges (where torchvision reflect padding applies instead of the halo).
    """
    _, th, w = x.shape

    # ---- vertical 3-tap pass (sublane axis) ----
    x_p1 = shift(x, 1, 1)            # row i-1 (band row 0 fixed below)
    x_m1 = shift(x, -1, 1)           # row i+1 (band row TH-1 fixed below)
    top = x_m1[:, 0:1, :]            # reflect: row -1 -> row 1
    bot = x_p1[:, th - 1:th, :]      # reflect: row H  -> row H-2
    if top_halo is not None:
        top = jnp.where(is_first, top, top_halo)
        bot = jnp.where(is_last, bot, bot_halo)
    row = lax.broadcasted_iota(jnp.int32, (1, th, 1), 1)
    x_up = jnp.where(row == 0, top, x_p1)
    x_dn = jnp.where(row == th - 1, bot, x_m1)
    v = w_mid * x + w_edge * (x_up + x_dn)

    # ---- horizontal 3-tap pass (lane axis), reflect at left/right image edges ----
    v_p1 = shift(v, 1, 2)            # col j-1
    v_m1 = shift(v, -1, 2)           # col j+1
    col = lax.broadcasted_iota(jnp.int32, (1, 1, w), 2)
    v_lf = jnp.where(col == 0, v_m1, v_p1)
    v_rt = jnp.where(col == w - 1, v_p1, v_m1)
    return w_mid * v + w_edge * (v_lf + v_rt)


def _blur_kernel_whole(w_ref, x_ref, out_ref, *, shift):
    # w_ref: SMEM (3,) separable weights (w[0] == w[2]); x/out: VMEM (B, H, W)
    x = x_ref[...].astype(jnp.float32)
    out = _blur_core(x, w_ref[0], w_ref[1], shift)
    out_ref[...] = _cast_out(out, out_ref.dtype)


def _blur_kernel_banded(w_ref, x_ref, top_ref, bot_ref, out_ref, *, shift):
    # Row-band variant: x/out are (B, TH, W) bands; top/bot are (B, 8, W) halo tiles
    # whose last / first row are the image rows just above / below this band.
    x = x_ref[...].astype(jnp.float32)
    h = pl.program_id(1)
    is_first = h == 0
    is_last = h == pl.num_programs(1) - 1
    rh = top_ref.shape[1]
    top_halo = top_ref[:, rh - 1:rh, :].astype(jnp.float32)
    bot_halo = bot_ref[:, 0:1, :].astype(jnp.float32)
    out = _blur_core(x, w_ref[0], w_ref[1], shift,
                     top_halo=top_halo, bot_halo=bot_halo,
                     is_first=is_first, is_last=is_last)
    out_ref[...] = _cast_out(out, out_ref.dtype)


# -----------------------------------------------------------------------------
# block / band sizing (generation aware)
# -----------------------------------------------------------------------------

def _tpu_budget():
    """(per-step input budget bytes, scoped vmem_limit_bytes, TensorCores per chip)."""
    vmem_phys = 128 * 1024 * 1024
    try:
        vmem_phys = int(pltpu.get_tpu_info().vmem_capacity_bytes)
    except Exception:
        pass
    kind = ""
    try:
        kind = jax.devices()[0].device_kind.lower()
    except Exception:
        pass
    num_tc = 2 if ("v7" in kind or "v4" in kind or "v5p" in kind) else 1
    if vmem_phys <= 64 * 1024 * 1024 or "v7" in kind:
        # v7x-class: 64 MiB VMEM per TensorCore -> smaller blocks, <= 48 MiB scoped.
        return 4 * 1024 * 1024, 48 * 1024 * 1024, num_tc
    # v5e / v6e class: 128 MiB VMEM -> ~8 MiB input blocks, 96 MiB scoped.
    return 8 * 1024 * 1024, 96 * 1024 * 1024, num_tc


def _choose_block_planes(num_planes, plane_bytes, budget_bytes, num_tc):
    """Planes per grid step: largest divisor of num_planes within the VMEM budget.
    Only multi-TensorCore chips prefer a step count divisible by the TC count so the
    'parallel' grid axis load-balances across cores (on 1-TC parts that cap is a pure
    block-size loss)."""
    cap = min(num_planes, max(1, budget_bytes // max(plane_bytes, 1)))
    divisors = [d for d in range(1, cap + 1) if num_planes % d == 0]
    if num_tc > 1:
        balanced = [d for d in divisors if (num_planes // d) % num_tc == 0]
        if balanced:
            return max(balanced)
    return max(divisors)


def _choose_band_rows(H, W, itemsize, budget_bytes):
    """Rows per band (H when a whole plane fits the per-step budget)."""
    if H * W * itemsize <= budget_bytes:
        return H
    if H % _HALO_ROWS != 0:
        # TODO(synk): banding for H % 8 != 0 needs padded halo tiles; whole-plane fallback.
        return H
    cap = max(_HALO_ROWS, (budget_bytes // (W * itemsize)) // _HALO_ROWS * _HALO_ROWS)
    best = _HALO_ROWS
    for rows in range(_HALO_ROWS, min(cap, H) + 1, _HALO_ROWS):
        if H % rows == 0:
            best = rows
    return best


# -----------------------------------------------------------------------------
# wrapper
# -----------------------------------------------------------------------------

def gaussian_blur_pallas(img, kernel1d, *, band_rows=None):
    """Depthwise separable 3x3 Gaussian blur, reflect padding (torchvision semantics).

    img: (N, C, H, W); kernel1d: (3,) f32.  The image is streamed HBM->VMEM exactly
    once and written once; the reflect halo is synthesized in VMEM (no jnp.pad).
    `band_rows` forces row-band tiling (used for testing); by default bands only kick
    in when a single plane exceeds the per-step VMEM budget (e.g. >=1080p f32 on v7x).
    """
    N, C, H, W = img.shape
    assert H >= 2 and W >= 2, "reflect padding needs H >= 2 and W >= 2"
    nc = N * C
    x = img.reshape(nc, H, W)
    itemsize = jnp.dtype(img.dtype).itemsize

    budget, vmem_limit, num_tc = _tpu_budget()
    shift = _pick_shift_fn()

    plane_bytes = H * W * itemsize
    bp = _choose_block_planes(nc, plane_bytes, budget, num_tc)
    if band_rows is None:
        th = _choose_band_rows(H, W, itemsize, budget) if bp == 1 else H
    else:
        th = band_rows
    assert H % th == 0 and (th == H or th % _HALO_ROWS == 0)

    # TODO(synk): for lane density, pad W to a multiple of 128 (or pack several small
    # planes side-by-side along the lane axis) upstream; W < 128 wastes vst lanes.
    # TODO(synk): keep the vertical pass in bf16 on v6e/v7x for bf16 inputs (native
    # bf16 VPU); everything currently accumulates in f32.

    smem_spec = pl.BlockSpec(memory_space=pltpu.SMEM)

    if th == H:
        grid = (nc // bp,)
        kernel = functools.partial(_blur_kernel_whole, shift=shift)
        in_specs = [smem_spec,
                    pl.BlockSpec((bp, H, W), lambda i: (i, 0, 0))]
        out_specs = pl.BlockSpec((bp, H, W), lambda i: (i, 0, 0))
        dims = ("parallel",)
        operands = (kernel1d, x)
    else:
        nb = H // th
        tiles_per_band = th // _HALO_ROWS
        n_row_tiles = H // _HALO_ROWS
        grid = (nc // bp, nb)
        kernel = functools.partial(_blur_kernel_banded, shift=shift)
        in_specs = [
            smem_spec,
            pl.BlockSpec((bp, th, W), lambda p, h: (p, h, 0)),
            # 8-row halo tiles whose last / first row sit just above / below the band
            # (clamped at the image edges, where the kernel reflects in-band instead).
            pl.BlockSpec((bp, _HALO_ROWS, W),
                         lambda p, h: (p, jnp.maximum(h * tiles_per_band - 1, 0), 0)),
            pl.BlockSpec((bp, _HALO_ROWS, W),
                         lambda p, h: (p, jnp.minimum((h + 1) * tiles_per_band,
                                                      n_row_tiles - 1), 0)),
        ]
        out_specs = pl.BlockSpec((bp, th, W), lambda p, h: (p, h, 0))
        dims = ("parallel", "parallel")
        operands = (kernel1d, x, x, x)

    out = pl.pallas_call(
        kernel,
        out_shape=jax.ShapeDtypeStruct((nc, H, W), img.dtype),
        grid=grid,
        in_specs=in_specs,
        out_specs=out_specs,
        compiler_params=pltpu.CompilerParams(
            dimension_semantics=dims,
            vmem_limit_bytes=vmem_limit,
        ),
    )(*operands)
    return out.reshape(N, C, H, W)


def random_gaussian_blur(img, target, key):
    """Forward pass of RandomGaussianBlur: with prob p=0.2, blur img with a randomly
    sampled sigma; target passes through unchanged.  A single coin flip / sigma per
    call matches the module (one sample per forward).  NOTE: under vmap (or when XLA
    converts cond to select) both branches execute, so the blur's HBM traffic is only
    truly skipped when called un-batched."""
    k_apply, k_sigma = jax.random.split(key)
    u = jax.random.uniform(k_apply, ())                                   # torch.rand(1)
    sigma = jax.random.uniform(k_sigma, (), minval=SIGMA_LO, maxval=SIGMA_HI)
    kernel1d = _gaussian_kernel1d(sigma)
    img_out = lax.cond(
        u < P_APPLY,
        lambda im, w: gaussian_blur_pallas(im, w),
        lambda im, w: im,
        img, kernel1d,
    )
    return img_out, target


def _reference_blur(img, kernel1d):
    """Pure-JAX reference (reflect pad + 9-tap outer-product conv)."""
    N, C, H, W = img.shape
    xpad = jnp.pad(img.astype(jnp.float32), ((0, 0), (0, 0), (1, 1), (1, 1)),
                   mode="reflect")
    acc = jnp.zeros((N, C, H, W), jnp.float32)
    for di in range(KSIZE):
        for dj in range(KSIZE):
            acc = acc + kernel1d[di] * kernel1d[dj] * xpad[:, :, di:di + H, dj:dj + W]
    return acc.astype(img.dtype)


if __name__ == "__main__":
    key = jax.random.PRNGKey(0)
    k_img, k_tgt, k_sig, k_fwd, k_img2 = jax.random.split(key, 5)

    # Small NCHW image consistent with the module's forward.
    img = jax.random.uniform(k_img, (2, 4, 16, 16), dtype=jnp.float32)
    target = {"boxes": jax.random.uniform(k_tgt, (3, 4), dtype=jnp.float32),
              "labels": jnp.array([1, 2, 3], dtype=jnp.int32)}

    sigma = jax.random.uniform(k_sig, (), minval=SIGMA_LO, maxval=SIGMA_HI)
    kernel1d = _gaussian_kernel1d(sigma)

    # 1) Whole-plane path vs pure-JAX reference.
    blurred = gaussian_blur_pallas(img, kernel1d)
    jax.block_until_ready(blurred)
    ref = _reference_blur(img, kernel1d)
    assert blurred.shape == img.shape and blurred.dtype == img.dtype
    assert float(jnp.max(jnp.abs(blurred - ref))) < 1e-5

    # 2) Row-band tiled path (forced small bands: first / interior / last band + halos).
    img2 = jax.random.uniform(k_img2, (1, 2, 48, 128), dtype=jnp.float32)
    blurred2 = gaussian_blur_pallas(img2, kernel1d, band_rows=16)
    jax.block_until_ready(blurred2)
    ref2 = _reference_blur(img2, kernel1d)
    assert float(jnp.max(jnp.abs(blurred2 - ref2))) < 1e-5

    # 3) Full module forward (p=0.2 gate via lax.cond; blur only runs when the flip hits).
    out_img, out_target = random_gaussian_blur(img, target, k_fwd)
    jax.block_until_ready(out_img)
    jax.block_until_ready(out_target["boxes"])
    assert out_img.shape == img.shape and out_img.dtype == img.dtype

    print("KERNEL_OK")
</pallas_src>

<mosaic_0001>
module attributes {stable_mosaic.version = 11 : i64} {
  func.func @_blur_kernel_whole(%arg0: i32, %arg1: memref<3xf32, #tpu.memory_space<smem>>, %arg2: memref<8x16x16xf32, #tpu.memory_space<vmem>>, %arg3: memref<8x16x16xf32, #tpu.memory_space<vmem>>) attributes {dimension_semantics = [#tpu.dimension_semantics<parallel>], iteration_bounds = array<i64: 1>, scalar_prefetch = 0 : i64, scratch_operands = 0 : i64, tpu.core_type = #tpu.core_type<tc>, window_params = [{transform_indices = @transform_0, window_bounds = array<i64: 3>}, {transform_indices = @transform_1, window_bounds = array<i64: 8, 16, 16>}, {transform_indices = @transform_2, window_bounds = array<i64: 8, 16, 16>}]} {
    %c0 = arith.constant 0 : index
    %c0_0 = arith.constant 0 : index
    %c0_1 = arith.constant 0 : index
    %0 = vector.load %arg2[%c0, %c0_0, %c0_1] : memref<8x16x16xf32, #tpu.memory_space<vmem>>, vector<8x16x16xf32>
    %c0_2 = arith.constant 0 : index
    %1 = memref.load %arg1[%c0_2] : memref<3xf32, #tpu.memory_space<smem>>
    %c1 = arith.constant 1 : index
    %2 = memref.load %arg1[%c1] : memref<3xf32, #tpu.memory_space<smem>>
    %3 = vector.extract_strided_slice %0 {offsets = [0, 0, 0], sizes = [8, 1, 16], strides = [1, 1, 1]} : vector<8x16x16xf32> to vector<8x1x16xf32>
    %4 = vector.extract_strided_slice %0 {offsets = [0, 0, 0], sizes = [8, 15, 16], strides = [1, 1, 1]} : vector<8x16x16xf32> to vector<8x15x16xf32>
    %5 = tpu.concatenate %3, %4 in 1 : vector<8x1x16xf32>, vector<8x15x16xf32> -> vector<8x16x16xf32>
    %6 = vector.extract_strided_slice %0 {offsets = [0, 1, 0], sizes = [8, 15, 16], strides = [1, 1, 1]} : vector<8x16x16xf32> to vector<8x15x16xf32>
    %7 = vector.extract_strided_slice %0 {offsets = [0, 15, 0], sizes = [8, 1, 16], strides = [1, 1, 1]} : vector<8x16x16xf32> to vector<8x1x16xf32>
    %8 = tpu.concatenate %6, %7 in 1 : vector<8x15x16xf32>, vector<8x1x16xf32> -> vector<8x16x16xf32>
    %9 = vector.extract_strided_slice %8 {offsets = [0, 0, 0], sizes = [8, 1, 16], strides = [1, 1, 1]} : vector<8x16x16xf32> to vector<8x1x16xf32>
    %10 = vector.extract_strided_slice %5 {offsets = [0, 15, 0], sizes = [8, 1, 16], strides = [1, 1, 1]} : vector<8x16x16xf32> to vector<8x1x16xf32>
    %11 = tpu.iota {dimensions = array<i32: 1>} : vector<1x16x1xi32>
    %c0_i32 = arith.constant 0 : i32
    %12 = vector.broadcast %c0_i32 : i32 to vector<1x16x1xi32>
    %13 = arith.cmpi eq, %11, %12 : vector<1x16x1xi32>
    %14 = vector.shape_cast %13 : vector<1x16x1xi1> to vector<1x16x1xi1>
    %15 = vector.broadcast %14 : vector<1x16x1xi1> to vector<8x16x16xi1>
    %16 = vector.shape_cast %9 : vector<8x1x16xf32> to vector<8x1x16xf32>
    %17 = vector.broadcast %16 : vector<8x1x16xf32> to vector<8x16x16xf32>
    %18 = arith.select %15, %17, %5 : vector<8x16x16xi1>, vector<8x16x16xf32>
    %c15_i32 = arith.constant 15 : i32
    %19 = vector.broadcast %c15_i32 : i32 to vector<1x16x1xi32>
    %20 = arith.cmpi eq, %11, %19 : vector<1x16x1xi32>
    %21 = vector.shape_cast %20 : vector<1x16x1xi1> to vector<1x16x1xi1>
    %22 = vector.broadcast %21 : vector<1x16x1xi1> to vector<8x16x16xi1>
    %23 = vector.shape_cast %10 : vector<8x1x16xf32> to vector<8x1x16xf32>
    %24 = vector.broadcast %23 : vector<8x1x16xf32> to vector<8x16x16xf32>
    %25 = arith.select %22, %24, %8 : vector<8x16x16xi1>, vector<8x16x16xf32>
    %26 = vector.broadcast %2 : f32 to vector<8x16x16xf32>
    %27 = arith.mulf %26, %0 : vector<8x16x16xf32>
    %28 = arith.addf %18, %25 : vector<8x16x16xf32>
    %29 = vector.broadcast %1 : f32 to vector<8x16x16xf32>
    %30 = arith.mulf %29, %28 : vector<8x16x16xf32>
    %31 = arith.addf %27, %30 : vector<8x16x16xf32>
    %32 = vector.extract_strided_slice %31 {offsets = [0, 0, 0], sizes = [8, 16, 1], strides = [1, 1, 1]} : vector<8x16x16xf32> to vector<8x16x1xf32>
    %33 = vector.extract_strided_slice %31 {offsets = [0, 0, 0], sizes = [8, 16, 15], strides = [1, 1, 1]} : vector<8x16x16xf32> to vector<8x16x15xf32>
    %34 = tpu.concatenate %32, %33 in 2 : vector<8x16x1xf32>, vector<8x16x15xf32> -> vector<8x16x16xf32>
    %35 = vector.extract_strided_slice %31 {offsets = [0, 0, 1], sizes = [8, 16, 15], strides = [1, 1, 1]} : vector<8x16x16xf32> to vector<8x16x15xf32>
    %36 = vector.extract_strided_slice %31 {offsets = [0, 0, 15], sizes = [8, 16, 1], strides = [1, 1, 1]} : vector<8x16x16xf32> to vector<8x16x1xf32>
    %37 = tpu.concatenate %35, %36 in 2 : vector<8x16x15xf32>, vector<8x16x1xf32> -> vector<8x16x16xf32>
    %38 = tpu.iota {dimensions = array<i32: 2>} : vector<1x1x16xi32>
    %c0_i32_3 = arith.constant 0 : i32
    %39 = vector.broadcast %c0_i32_3 : i32 to vector<1x1x16xi32>
    %40 = arith.cmpi eq, %38, %39 : vector<1x1x16xi32>
    %41 = vector.shape_cast %40 : vector<1x1x16xi1> to vector<1x1x16xi1>
    %42 = vector.broadcast %41 : vector<1x1x16xi1> to vector<8x16x16xi1>
    %43 = arith.select %42, %37, %34 : vector<8x16x16xi1>, vector<8x16x16xf32>
    %c15_i32_4 = arith.constant 15 : i32
    %44 = vector.broadcast %c15_i32_4 : i32 to vector<1x1x16xi32>
    %45 = arith.cmpi eq, %38, %44 : vector<1x1x16xi32>
    %46 = vector.shape_cast %45 : vector<1x1x16xi1> to vector<1x1x16xi1>
    %47 = vector.broadcast %46 : vector<1x1x16xi1> to vector<8x16x16xi1>
    %48 = arith.select %47, %34, %37 : vector<8x16x16xi1>, vector<8x16x16xf32>
    %49 = vector.broadcast %2 : f32 to vector<8x16x16xf32>
    %50 = arith.mulf %49, %31 : vector<8x16x16xf32>
    %51 = arith.addf %43, %48 : vector<8x16x16xf32>
    %52 = vector.broadcast %1 : f32 to vector<8x16x16xf32>
    %53 = arith.mulf %52, %51 : vector<8x16x16xf32>
    %54 = arith.addf %50, %53 : vector<8x16x16xf32>
    %c0_5 = arith.constant 0 : index
    %c0_6 = arith.constant 0 : index
    %c0_7 = arith.constant 0 : index
    %55 = vector.load %arg3[%c0_5, %c0_6, %c0_7] : memref<8x16x16xf32, #tpu.memory_space<vmem>>, vector<8x16x16xf32>
    tpu.vector_store %arg3[%c0_5, %c0_6, %c0_7], %54 {strides = array<i32>} : memref<8x16x16xf32, #tpu.memory_space<vmem>>, vector<8x16x16xf32>,
    return
  }
  func.func @transform_0(%arg0: i32) -> i32 {
    %c0_i32 = arith.constant 0 : i32
    %c0_i32_0 = arith.constant 0 : i32
    return %c0_i32 : i32
  }
  func.func @transform_1(%arg0: i32) -> (i32, i32, i32) {
    %c0_i32 = arith.constant 0 : i32
    %c0_i32_0 = arith.constant 0 : i32
    %c0_i32_1 = arith.constant 0 : i32
    return %arg0, %c0_i32, %c0_i32_0 : i32, i32, i32
  }
  func.func @transform_2(%arg0: i32) -> (i32, i32, i32) {
    %c0_i32 = arith.constant 0 : i32
    %c0_i32_0 = arith.constant 0 : i32
    %c0_i32_1 = arith.constant 0 : i32
    return %arg0, %c0_i32, %c0_i32_0 : i32, i32, i32
  }
}

</mosaic_0001>

<llo_original>
// kernel: tpu_custom_call.1
$region0: #{tpu_custom_call.1}
  #allocation0 [shape = 'u32[]', space=smem, size = 0x4, offset = 0x4, fixed_abs, tag = 'smem constant byte address 0x4 - core index']
  #allocation1 [shape = 'u32[144,128]{1,0:T(1,128)}', space=vmem, size = 0x12000, scoped, tag = 'internal scratch']
  %s0 = inlined_call_operand.hbm [shape: f32[3], index: 0, kind: input, shape index: {}]
  %s1 = inlined_call_operand.hbm [shape: f32[8,16,16], index: 1, kind: input, shape index: {}]
  %s2 = inlined_call_operand.hbm [shape: f32[8,16,16], index: 2, kind: output, shape index: {}]
  %s3 = sld [smem:[#allocation0]]
  $region26: #{tpu_custom_call.1} parent=0
    _
  %s5 = ssub.s32 1, %s3
  %s6 = scalar_select 0, %s5, %s3
  $region1: #{tpu_custom_call.1} parent=0
    #allocation2 [shape = 'u8[512]{0}', space=smem, size = 0x200, scoped, tag = 'input window, operand 0, single buffered']
    #allocation3 [shape = 's32[1]{0}', space=sflag, size = 0x4, scoped, tag = 'scoped memory for tpu_custom_call.1']
    #allocation4 [shape = 's32[1]{0}', space=sflag, size = 0x4, scoped, tag = 'scoped memory for tpu_custom_call.1']
    #allocation5 [shape = 's32[1]{0}', space=sflag, size = 0x4, scoped, tag = 'scoped memory for tpu_custom_call.1']
    #allocation6 [shape = 'u8[65536]{0}', space=vmem, size = 0x10000, scoped, tag = 'input window, operand 1, single buffered']
    #allocation7 [shape = 'u8[65536]{0}', space=vmem, size = 0x10000, scoped, tag = 'output window, operand 0, single buffered']
    %7 = vsyncpa [#allocation5], 0
    %8 = vsyncpa [#allocation3], 0
    %9 = vsyncpa [#allocation4], 0
    // Predicated region
    $region2: #{tpu_custom_call.1} parent=1 // pred_check
      _
    $region3: #{tpu_custom_call.1} parent=1 // pred_check_branch
      %11 = sbr.rel (0) target = $region5
    $region4: #{tpu_custom_call.1} parent=1 // pred_region
      %s13 = ssub.s32 16, 16
      %14 = vsyncadd [#allocation5], %s13
      %17 = dma.hbm_to_smem %s0, 16, [#allocation2], [#allocation5]
    $region5: #{tpu_custom_call.1} parent=1 // pred_fallthru
      _
    // Predicated region
    $region6: #{tpu_custom_call.1} parent=1 // pred_check
      _
    $region7: #{tpu_custom_call.1} parent=1 // pred_check_branch
      %19 = sbr.rel (0) target = $region9
    $region8: #{tpu_custom_call.1} parent=1 // pred_region
      %s21 = ssub.s32 2048, 2048
      %22 = vsyncadd [#allocation3], %s21
      %s23 = sshll.u32 [#allocation6], 4
      %s24 = int_to_ptr.vmem [resolvable:$true] %s23
      %29 = dma.hbm_to_vmem [thread:$0]  %s1, 2048, %s24, [#allocation3], 128, 128, 8
    $region9: #{tpu_custom_call.1} parent=1 // pred_fallthru
      _
    // Predicated region
    $region10: #{tpu_custom_call.1} parent=1 // pred_check
      _
    $region11: #{tpu_custom_call.1} parent=1 // pred_check_branch
      %31 = sbr.rel (0) target = $region13
    $region12: #{tpu_custom_call.1} parent=1 // pred_region
      %32 = dma.done [#allocation5], 16
    $region13: #{tpu_custom_call.1} parent=1 // pred_fallthru
      _
    // Predicated region
    $region14: #{tpu_custom_call.1} parent=1 // pred_check
      _
    $region15: #{tpu_custom_call.1} parent=1 // pred_check_branch
      %34 = sbr.rel (0) target = $region17
    $region16: #{tpu_custom_call.1} parent=1 // pred_region
      %35 = dma.done [#allocation3], 2048
    $region17: #{tpu_custom_call.1} parent=1 // pred_fallthru
      _
    %36 = sfence
    %v37 = vld [vmem:[#allocation6] sm:$0xff]
    %v38 = vld [vmem:[#allocation6 + $0x8] sm:$0xff]
    %v39 = vld [vmem:[#allocation6 + $0x10] sm:$0xff]
    %v40 = vld [vmem:[#allocation6 + $0x18] sm:$0xff]
    %v41 = vld [vmem:[#allocation6 + $0x20] sm:$0xff]
    %v42 = vld [vmem:[#allocation6 + $0x28] sm:$0xff]
    %v43 = vld [vmem:[#allocation6 + $0x30] sm:$0xff]
    %v44 = vld [vmem:[#allocation6 + $0x38] sm:$0xff]
    %v45 = vld [vmem:[#allocation6 + $0x40] sm:$0xff]
    %v46 = vld [vmem:[#allocation6 + $0x48] sm:$0xff]
    %v47 = vld [vmem:[#allocation6 + $0x50] sm:$0xff]
    %v48 = vld [vmem:[#allocation6 + $0x58] sm:$0xff]
    %v49 = vld [vmem:[#allocation6 + $0x60] sm:$0xff]
    %v50 = vld [vmem:[#allocation6 + $0x68] sm:$0xff]
    %v51 = vld [vmem:[#allocation6 + $0x70] sm:$0xff]
    %v52 = vld [vmem:[#allocation6 + $0x78] sm:$0xff]
    %s53 = sld [smem:[#allocation2]]
    %s54 = sld [smem:[#allocation2 + $0x1]]
    %vm71 = vcmask 1040384
    %v72 = vrot.slane %v37, 7
    %v73 = vrot.slane %v38, 7
    %v74 = vsel %vm71, %v72, %v73
    %v75 = vrot.slane %v39, 7
    %v76 = vrot.slane %v40, 7
    %v77 = vsel %vm71, %v75, %v76
    %v78 = vrot.slane %v41, 7
    %v79 = vrot.slane %v42, 7
    %v80 = vsel %vm71, %v78, %v79
    %v81 = vrot.slane %v43, 7
    %v82 = vrot.slane %v44, 7
    %v83 = vsel %vm71, %v81, %v82
    %v84 = vrot.slane %v45, 7
    %v85 = vrot.slane %v46, 7
    %v86 = vsel %vm71, %v84, %v85
    %v87 = vrot.slane %v47, 7
    %v88 = vrot.slane %v48, 7
    %v89 = vsel %vm71, %v87, %v88
    %v90 = vrot.slane %v49, 7
    %v91 = vrot.slane %v50, 7
    %v92 = vsel %vm71, %v90, %v91
    %v93 = vrot.slane %v51, 7
    %v94 = vrot.slane %v52, 7
    %v95 = vsel %vm71, %v93, %v94
    %v112 = vsel %vm71, %v37, %v72
    %v113 = vsel %vm71, %v39, %v75
    %v114 = vsel %vm71, %v41, %v78
    %v115 = vsel %vm71, %v43, %v81
    %v116 = vsel %vm71, %v45, %v84
    %v117 = vsel %vm71, %v47, %v87
    %v118 = vsel %vm71, %v49, %v90
    %v119 = vsel %vm71, %v51, %v93
    %vm120 = vcmask 1046528
    %v121 = vrot.slane %v37, 1
    %v122 = vrot.slane %v38, 1
    %v123 = vsel %vm120, %v121, %v122
    %v124 = vrot.slane %v39, 1
    %v125 = vrot.slane %v40, 1
    %v126 = vsel %vm120, %v124, %v125
    %v127 = vrot.slane %v41, 1
    %v128 = vrot.slane %v42, 1
    %v129 = vsel %vm120, %v127, %v128
    %v130 = vrot.slane %v43, 1
    %v131 = vrot.slane %v44, 1
    %v132 = vsel %vm120, %v130, %v131
    %v133 = vrot.slane %v45, 1
    %v134 = vrot.slane %v46, 1
    %v135 = vsel %vm120, %v133, %v134
    %v136 = vrot.slane %v47, 1
    %v137 = vrot.slane %v48, 1
    %v138 = vsel %vm120, %v136, %v137
    %v139 = vrot.slane %v49, 1
    %v140 = vrot.slane %v50, 1
    %v141 = vsel %vm120, %v139, %v140
    %v142 = vrot.slane %v51, 1
    %v143 = vrot.slane %v52, 1
    %v144 = vsel %vm120, %v142, %v143
    %v161 = vsel %vm120, %v122, %v38
    %v162 = vsel %vm120, %v125, %v40
    %v163 = vsel %vm120, %v128, %v42
    %v164 = vsel %vm120, %v131, %v44
    %v165 = vsel %vm120, %v134, %v46
    %v166 = vsel %vm120, %v137, %v48
    %v167 = vsel %vm120, %v140, %v50
    %v168 = vsel %vm120, %v143, %v52
    %v169 = vlaneseq
    %v170 = vshrl.u32 %v169, 7
    %v171 = vadd.s32 %v170, 8
    %vm172 = vcmp.eq.s32.totalorder %v170, 0
    %vm173 = vcmp.eq.s32.totalorder %v171, 0
    %v174 = vsel %vm172, 1, 0
    %v175 = vsel %vm173, 1, 0
    %vm176 = vcmp.eq.s32.totalorder %v174, 1
    %vm177 = vcmp.eq.s32.totalorder %v175, 1
    %v178 = vlaneseq
    %v179 = vshrl.u32 %v178, 7
    %v180 = vsub.s32 0, %v179
    %v181 = vrot.slane %v123, %v180
    %v182 = vlaneseq
    %v183 = vshrl.u32 %v182, 7
    %v184 = vsub.s32 0, %v183
    %v185 = vrot.slane %v126, %v184
    %v186 = vlaneseq
    %v187 = vshrl.u32 %v186, 7
    %v188 = vsub.s32 0, %v187
    %v189 = vrot.slane %v129, %v188
    %v190 = vlaneseq
    %v191 = vshrl.u32 %v190, 7
    %v192 = vsub.s32 0, %v191
    %v193 = vrot.slane %v132, %v192
    %v194 = vlaneseq
    %v195 = vshrl.u32 %v194, 7
    %v196 = vsub.s32 0, %v195
    %v197 = vrot.slane %v135, %v196
    %v198 = vlaneseq
    %v199 = vshrl.u32 %v198, 7
    %v200 = vsub.s32 0, %v199
    %v201 = vrot.slane %v138, %v200
    %v202 = vlaneseq
    %v203 = vshrl.u32 %v202, 7
    %v204 = vsub.s32 0, %v203
    %v205 = vrot.slane %v141, %v204
    %v206 = vlaneseq
    %v207 = vshrl.u32 %v206, 7
    %v208 = vsub.s32 0, %v207
    %v209 = vrot.slane %v144, %v208
    %v210 = vsel %vm176, %v181, %v112
    %v211 = vsel %vm177, %v181, %v74
    %v212 = vsel %vm176, %v185, %v113
    %v213 = vsel %vm177, %v185, %v77
    %v214 = vsel %vm176, %v189, %v114
    %v215 = vsel %vm177, %v189, %v80
    %v216 = vsel %vm176, %v193, %v115
    %v217 = vsel %vm177, %v193, %v83
    %v218 = vsel %vm176, %v197, %v116
    %v219 = vsel %vm177, %v197, %v86
    %v220 = vsel %vm176, %v201, %v117
    %v221 = vsel %vm177, %v201, %v89
    %v222 = vsel %vm176, %v205, %v118
    %v223 = vsel %vm177, %v205, %v92
    %v224 = vsel %vm176, %v209, %v119
    %v225 = vsel %vm177, %v209, %v95
    %vm226 = vcmp.eq.s32.totalorder %v170, 15
    %vm227 = vcmp.eq.s32.totalorder %v171, 15
    %v228 = vsel %vm226, 1, 0
    %v229 = vsel %vm227, 1, 0
    %vm230 = vcmp.eq.s32.totalorder %v228, 1
    %vm231 = vcmp.eq.s32.totalorder %v229, 1
    %v232 = vlaneseq
    %v233 = vshrl.u32 %v232, 7
    %v234 = vsub.s32 7, %v233
    %v235 = vrot.slane %v74, %v234
    %v236 = vlaneseq
    %v237 = vshrl.u32 %v236, 7
    %v238 = vsub.s32 7, %v237
    %v239 = vrot.slane %v77, %v238
    %v240 = vlaneseq
    %v241 = vshrl.u32 %v240, 7
    %v242 = vsub.s32 7, %v241
    %v243 = vrot.slane %v80, %v242
    %v244 = vlaneseq
    %v245 = vshrl.u32 %v244, 7
    %v246 = vsub.s32 7, %v245
    %v247 = vrot.slane %v83, %v246
    %v248 = vlaneseq
    %v249 = vshrl.u32 %v248, 7
    %v250 = vsub.s32 7, %v249
    %v251 = vrot.slane %v86, %v250
    %v252 = vlaneseq
    %v253 = vshrl.u32 %v252, 7
    %v254 = vsub.s32 7, %v253
    %v255 = vrot.slane %v89, %v254
    %v256 = vlaneseq
    %v257 = vshrl.u32 %v256, 7
    %v258 = vsub.s32 7, %v257
    %v259 = vrot.slane %v92, %v258
    %v260 = vlaneseq
    %v261 = vshrl.u32 %v260, 7
    %v262 = vsub.s32 7, %v261
    %v263 = vrot.slane %v95, %v262
    %v264 = vsel %vm230, %v235, %v123
    %v265 = vsel %vm231, %v235, %v161
    %v266 = vsel %vm230, %v239, %v126
    %v267 = vsel %vm231, %v239, %v162
    %v268 = vsel %vm230, %v243, %v129
    %v269 = vsel %vm231, %v243, %v163
    %v270 = vsel %vm230, %v247, %v132
    %v271 = vsel %vm231, %v247, %v164
    %v272 = vsel %vm230, %v251, %v135
    %v273 = vsel %vm231, %v251, %v165
    %v274 = vsel %vm230, %v255, %v138
    %v275 = vsel %vm231, %v255, %v166
    %v276 = vsel %vm230, %v259, %v141
    %v277 = vsel %vm231, %v259, %v167
    %v278 = vsel %vm230, %v263, %v144
    %v279 = vsel %vm231, %v263, %v168
    %v280 = vstv %s54
    %v281 = vmul.f32 %v280, %v37
    %v282 = vmul.f32 %v280, %v38
    %v283 = vmul.f32 %v280, %v39
    %v284 = vmul.f32 %v280, %v40
    %v285 = vmul.f32 %v280, %v41
    %v286 = vmul.f32 %v280, %v42
    %v287 = vmul.f32 %v280, %v43
    %v288 = vmul.f32 %v280, %v44
    %v289 = vmul.f32 %v280, %v45
    %v290 = vmul.f32 %v280, %v46
    %v291 = vmul.f32 %v280, %v47
    %v292 = vmul.f32 %v280, %v48
    %v293 = vmul.f32 %v280, %v49
    %v294 = vmul.f32 %v280, %v50
    %v295 = vmul.f32 %v280, %v51
    %v296 = vmul.f32 %v280, %v52
    %v297 = vadd.f32 %v210, %v264
    %v298 = vadd.f32 %v211, %v265
    %v299 = vadd.f32 %v212, %v266
    %v300 = vadd.f32 %v213, %v267
    %v301 = vadd.f32 %v214, %v268
    %v302 = vadd.f32 %v215, %v269
    %v303 = vadd.f32 %v216, %v270
    %v304 = vadd.f32 %v217, %v271
    %v305 = vadd.f32 %v218, %v272
    %v306 = vadd.f32 %v219, %v273
    %v307 = vadd.f32 %v220, %v274
    %v308 = vadd.f32 %v221, %v275
    %v309 = vadd.f32 %v222, %v276
    %v310 = vadd.f32 %v223, %v277
    %v311 = vadd.f32 %v224, %v278
    %v312 = vadd.f32 %v225, %v279
    %v313 = vstv %s53
    %v314 = vmul.f32 %v313, %v297
    %v315 = vmul.f32 %v313, %v298
    %v316 = vmul.f32 %v313, %v299
    %v317 = vmul.f32 %v313, %v300
    %v318 = vmul.f32 %v313, %v301
    %v319 = vmul.f32 %v313, %v302
    %v320 = vmul.f32 %v313, %v303
    %v321 = vmul.f32 %v313, %v304
    %v322 = vmul.f32 %v313, %v305
    %v323 = vmul.f32 %v313, %v306
    %v324 = vmul.f32 %v313, %v307
    %v325 = vmul.f32 %v313, %v308
    %v326 = vmul.f32 %v313, %v309
    %v327 = vmul.f32 %v313, %v310
    %v328 = vmul.f32 %v313, %v311
    %v329 = vmul.f32 %v313, %v312
    %v330 = vadd.f32 %v281, %v314
    %v331 = vadd.f32 %v282, %v315
    %v332 = vadd.f32 %v283, %v316
    %v333 = vadd.f32 %v284, %v317
    %v334 = vadd.f32 %v285, %v318
    %v335 = vadd.f32 %v286, %v319
    %v336 = vadd.f32 %v287, %v320
    %v337 = vadd.f32 %v288, %v321
    %v338 = vadd.f32 %v289, %v322
    %v339 = vadd.f32 %v290, %v323
    %v340 = vadd.f32 %v291, %v324
    %v341 = vadd.f32 %v292, %v325
    %v342 = vadd.f32 %v293, %v326
    %v343 = vadd.f32 %v294, %v327
    %v344 = vadd.f32 %v295, %v328
    %v345 = vadd.f32 %v296, %v329
    %362 = vrot.lane.b32.xlu0 %v330, 1
    %v363 = vpop.permute.xlu0 %362
    %364 = vrot.lane.b32.xlu0 %v331, 1
    %v365 = vpop.permute.xlu0 %364
    %366 = vrot.lane.b32.xlu0 %v332, 1
    %v367 = vpop.permute.xlu0 %366
    %368 = vrot.lane.b32.xlu0 %v333, 1
    %v369 = vpop.permute.xlu0 %368
    %370 = vrot.lane.b32.xlu0 %v334, 1
    %v371 = vpop.permute.xlu0 %370
    %372 = vrot.lane.b32.xlu0 %v335, 1
    %v373 = vpop.permute.xlu0 %372
    %374 = vrot.lane.b32.xlu0 %v336, 1
    %v375 = vpop.permute.xlu0 %374
    %376 = vrot.lane.b32.xlu0 %v337, 1
    %v377 = vpop.permute.xlu0 %376
    %378 = vrot.lane.b32.xlu0 %v338, 1
    %v379 = vpop.permute.xlu0 %378
    %380 = vrot.lane.b32.xlu0 %v339, 1
    %v381 = vpop.permute.xlu0 %380
    %382 = vrot.lane.b32.xlu0 %v340, 1
    %v383 = vpop.permute.xlu0 %382
    %384 = vrot.lane.b32.xlu0 %v341, 1
    %v385 = vpop.permute.xlu0 %384
    %386 = vrot.lane.b32.xlu0 %v342, 1
    %v387 = vpop.permute.xlu0 %386
    %388 = vrot.lane.b32.xlu0 %v343, 1
    %v389 = vpop.permute.xlu0 %388
    %390 = vrot.lane.b32.xlu0 %v344, 1
    %v391 = vpop.permute.xlu0 %390
    %392 = vrot.lane.b32.xlu0 %v345, 1
    %v393 = vpop.permute.xlu0 %392
    %vm410 = vcmask 7168
    %v411 = vsel %vm410, %v330, %v363
    %v412 = vsel %vm410, %v331, %v365
    %v413 = vsel %vm410, %v332, %v367
    %v414 = vsel %vm410, %v333, %v369
    %v415 = vsel %vm410, %v334, %v371
    %v416 = vsel %vm410, %v335, %v373
    %v417 = vsel %vm410, %v336, %v375
    %v418 = vsel %vm410, %v337, %v377
    %v419 = vsel %vm410, %v338, %v379
    %v420 = vsel %vm410, %v339, %v381
    %v421 = vsel %vm410, %v340, %v383
    %v422 = vsel %vm410, %v341, %v385
    %v423 = vsel %vm410, %v342, %v387
    %v424 = vsel %vm410, %v343, %v389
    %v425 = vsel %vm410, %v344, %v391
    %v426 = vsel %vm410, %v345, %v393
    %427 = vrot.lane.b32.xlu0 %v330, 127
    %v428 = vpop.permute.xlu0 %427
    %429 = vrot.lane.b32.xlu0 %v331, 127
    %v430 = vpop.permute.xlu0 %429
    %431 = vrot.lane.b32.xlu0 %v332, 127
    %v432 = vpop.permute.xlu0 %431
    %433 = vrot.lane.b32.xlu0 %v333, 127
    %v434 = vpop.permute.xlu0 %433
    %435 = vrot.lane.b32.xlu0 %v334, 127
    %v436 = vpop.permute.xlu0 %435
    %437 = vrot.lane.b32.xlu0 %v335, 127
    %v438 = vpop.permute.xlu0 %437
    %439 = vrot.lane.b32.xlu0 %v336, 127
    %v440 = vpop.permute.xlu0 %439
    %441 = vrot.lane.b32.xlu0 %v337, 127
    %v442 = vpop.permute.xlu0 %441
    %443 = vrot.lane.b32.xlu0 %v338, 127
    %v444 = vpop.permute.xlu0 %443
    %445 = vrot.lane.b32.xlu0 %v339, 127
    %v446 = vpop.permute.xlu0 %445
    %447 = vrot.lane.b32.xlu0 %v340, 127
    %v448 = vpop.permute.xlu0 %447
    %449 = vrot.lane.b32.xlu0 %v341, 127
    %v450 = vpop.permute.xlu0 %449
    %451 = vrot.lane.b32.xlu0 %v342, 127
    %v452 = vpop.permute.xlu0 %451
    %453 = vrot.lane.b32.xlu0 %v343, 127
    %v454 = vpop.permute.xlu0 %453
    %455 = vrot.lane.b32.xlu0 %v344, 127
    %v456 = vpop.permute.xlu0 %455
    %457 = vrot.lane.b32.xlu0 %v345, 127
    %v458 = vpop.permute.xlu0 %457
    %vm475 = vcmask 121856
    %v476 = vsel %vm475, %v428, %v330
    %v477 = vsel %vm475, %v430, %v331
    %v478 = vsel %vm475, %v432, %v332
    %v479 = vsel %vm475, %v434, %v333
    %v480 = vsel %vm475, %v436, %v334
    %v481 = vsel %vm475, %v438, %v335
    %v482 = vsel %vm475, %v440, %v336
    %v483 = vsel %vm475, %v442, %v337
    %v484 = vsel %vm475, %v444, %v338
    %v485 = vsel %vm475, %v446, %v339
    %v486 = vsel %vm475, %v448, %v340
    %v487 = vsel %vm475, %v450, %v341
    %v488 = vsel %vm475, %v452, %v342
    %v489 = vsel %vm475, %v454, %v343
    %v490 = vsel %vm475, %v456, %v344
    %v491 = vsel %vm475, %v458, %v345
    %v492 = vlaneseq
    %v493 = vand.u32 %v492, 127
    %vm494 = vcmp.eq.s32.totalorder %v493, 0
    %v495 = vsel %vm494, 1, 0
    %vm496 = vcmp.eq.s32.totalorder %v495, 1
    %v497 = vsel %vm496, %v476, %v411
    %v498 = vsel %vm496, %v477, %v412
    %v499 = vsel %vm496, %v478, %v413
    %v500 = vsel %vm496, %v479, %v414
    %v501 = vsel %vm496, %v480, %v415
    %v502 = vsel %vm496, %v481, %v416
    %v503 = vsel %vm496, %v482, %v417
    %v504 = vsel %vm496, %v483, %v418
    %v505 = vsel %vm496, %v484, %v419
    %v506 = vsel %vm496, %v485, %v420
    %v507 = vsel %vm496, %v486, %v421
    %v508 = vsel %vm496, %v487, %v422
    %v509 = vsel %vm496, %v488, %v423
    %v510 = vsel %vm496, %v489, %v424
    %v511 = vsel %vm496, %v490, %v425
    %v512 = vsel %vm496, %v491, %v426
    %vm513 = vcmp.eq.s32.totalorder %v493, 15
    %v514 = vsel %vm513, 1, 0
    %vm515 = vcmp.eq.s32.totalorder %v514, 1
    %v516 = vsel %vm515, %v411, %v476
    %v517 = vsel %vm515, %v412, %v477
    %v518 = vsel %vm515, %v413, %v478
    %v519 = vsel %vm515, %v414, %v479
    %v520 = vsel %vm515, %v415, %v480
    %v521 = vsel %vm515, %v416, %v481
    %v522 = vsel %vm515, %v417, %v482
    %v523 = vsel %vm515, %v418, %v483
    %v524 = vsel %vm515, %v419, %v484
    %v525 = vsel %vm515, %v420, %v485
    %v526 = vsel %vm515, %v421, %v486
    %v527 = vsel %vm515, %v422, %v487
    %v528 = vsel %vm515, %v423, %v488
    %v529 = vsel %vm515, %v424, %v489
    %v530 = vsel %vm515, %v425, %v490
    %v531 = vsel %vm515, %v426, %v491
    %v532 = vmul.f32 %v280, %v330
    %v533 = vmul.f32 %v280, %v331
    %v534 = vmul.f32 %v280, %v332
    %v535 = vmul.f32 %v280, %v333
    %v536 = vmul.f32 %v280, %v334
    %v537 = vmul.f32 %v280, %v335
    %v538 = vmul.f32 %v280, %v336
    %v539 = vmul.f32 %v280, %v337
    %v540 = vmul.f32 %v280, %v338
    %v541 = vmul.f32 %v280, %v339
    %v542 = vmul.f32 %v280, %v340
    %v543 = vmul.f32 %v280, %v341
    %v544 = vmul.f32 %v280, %v342
    %v545 = vmul.f32 %v280, %v343
    %v546 = vmul.f32 %v280, %v344
    %v547 = vmul.f32 %v280, %v345
    %v548 = vadd.f32 %v497, %v516
    %v549 = vadd.f32 %v498, %v517
    %v550 = vadd.f32 %v499, %v518
    %v551 = vadd.f32 %v500, %v519
    %v552 = vadd.f32 %v501, %v520
    %v553 = vadd.f32 %v502, %v521
    %v554 = vadd.f32 %v503, %v522
    %v555 = vadd.f32 %v504, %v523
    %v556 = vadd.f32 %v505, %v524
    %v557 = vadd.f32 %v506, %v525
    %v558 = vadd.f32 %v507, %v526
    %v559 = vadd.f32 %v508, %v527
    %v560 = vadd.f32 %v509, %v528
    %v561 = vadd.f32 %v510, %v529
    %v562 = vadd.f32 %v511, %v530
    %v563 = vadd.f32 %v512, %v531
    %v564 = vmul.f32 %v313, %v548
    %v565 = vmul.f32 %v313, %v549
    %v566 = vmul.f32 %v313, %v550
    %v567 = vmul.f32 %v313, %v551
    %v568 = vmul.f32 %v313, %v552
    %v569 = vmul.f32 %v313, %v553
    %v570 = vmul.f32 %v313, %v554
    %v571 = vmul.f32 %v313, %v555
    %v572 = vmul.f32 %v313, %v556
    %v573 = vmul.f32 %v313, %v557
    %v574 = vmul.f32 %v313, %v558
    %v575 = vmul.f32 %v313, %v559
    %v576 = vmul.f32 %v313, %v560
    %v577 = vmul.f32 %v313, %v561
    %v578 = vmul.f32 %v313, %v562
    %v579 = vmul.f32 %v313, %v563
    %v580 = vadd.f32 %v532, %v564
    %v581 = vadd.f32 %v533, %v565
    %v582 = vadd.f32 %v534, %v566
    %v583 = vadd.f32 %v535, %v567
    %v584 = vadd.f32 %v536, %v568
    %v585 = vadd.f32 %v537, %v569
    %v586 = vadd.f32 %v538, %v570
    %v587 = vadd.f32 %v539, %v571
    %v588 = vadd.f32 %v540, %v572
    %v589 = vadd.f32 %v541, %v573
    %v590 = vadd.f32 %v542, %v574
    %v591 = vadd.f32 %v543, %v575
    %v592 = vadd.f32 %v544, %v576
    %v593 = vadd.f32 %v545, %v577
    %v594 = vadd.f32 %v546, %v578
    %v595 = vadd.f32 %v547, %v579
    %vm596 = vcmask 130048
    %597 = vst.msk [vmem:[#allocation7] sm:$0xff] %vm596, %v580
    %598 = vst.msk [vmem:[#allocation7 + $0x8] sm:$0xff] %vm596, %v581
    %599 = vst.msk [vmem:[#allocation7 + $0x10] sm:$0xff] %vm596, %v582
    %600 = vst.msk [vmem:[#allocation7 + $0x18] sm:$0xff] %vm596, %v583
    %601 = vst.msk [vmem:[#allocation7 + $0x20] sm:$0xff] %vm596, %v584
    %602 = vst.msk [vmem:[#allocation7 + $0x28] sm:$0xff] %vm596, %v585
    %603 = vst.msk [vmem:[#allocation7 + $0x30] sm:$0xff] %vm596, %v586
    %604 = vst.msk [vmem:[#allocation7 + $0x38] sm:$0xff] %vm596, %v587
    %605 = vst.msk [vmem:[#allocation7 + $0x40] sm:$0xff] %vm596, %v588
    %606 = vst.msk [vmem:[#allocation7 + $0x48] sm:$0xff] %vm596, %v589
    %607 = vst.msk [vmem:[#allocation7 + $0x50] sm:$0xff] %vm596, %v590
    %608 = vst.msk [vmem:[#allocation7 + $0x58] sm:$0xff] %vm596, %v591
    %609 = vst.msk [vmem:[#allocation7 + $0x60] sm:$0xff] %vm596, %v592
    %610 = vst.msk [vmem:[#allocation7 + $0x68] sm:$0xff] %vm596, %v593
    %611 = vst.msk [vmem:[#allocation7 + $0x70] sm:$0xff] %vm596, %v594
    %612 = vst.msk [vmem:[#allocation7 + $0x78] sm:$0xff] %vm596, %v595
    // Predicated region
    $region18: #{tpu_custom_call.1} parent=1 // pred_check
      _
    $region19: #{tpu_custom_call.1} parent=1 // pred_check_branch
      %614 = sbr.rel (0) target = $region21
    $region20: #{tpu_custom_call.1} parent=1 // pred_region
      %s616 = ssub.s32 2048, 2048
      %617 = vsyncadd [#allocation4], %s616
      %s618 = sshll.u32 [#allocation7], 4
      %s619 = int_to_ptr.vmem [resolvable:$true] %s618
      %624 = dma.vmem_to_hbm [thread:$0]  %s619, 2048, %s2, [#allocation4], 128, 128, 8
    $region21: #{tpu_custom_call.1} parent=1 // pred_fallthru
      _
    // Predicated region
    $region22: #{tpu_custom_call.1} parent=1 // pred_check
      _
    $region23: #{tpu_custom_call.1} parent=1 // pred_check_branch
      %626 = sbr.rel (0) target = $region25
    $region24: #{tpu_custom_call.1} parent=1 // pred_region
      %627 = dma.done [#allocation4], 2048
    $region25: #{tpu_custom_call.1} parent=1 // pred_fallthru
      _
    %628 = vsyncpa [#allocation3], 1
    %629 = vsyncpa [#allocation4], 1
    %630 = vsyncpa [#allocation5], 1

</llo_original>
